<compile_context>
chip_gen: v7x
topology: tpu7x:2x2x1
jax: 0.10.0
libtpu: 0.0.40
codegen_flags: <defaults>
</compile_context>

<pallas_src>
import functools

import jax
import jax.numpy as jnp
from jax.experimental import pallas as pl
from jax.experimental.pallas import tpu as pltpu

# Sphere constants (match the PyTorch module exactly) — plain Python floats.
_S1_CX, _S1_CY, _S1_CZ = 0.5, 0.5, 0.5
_S1_RADIUS = 0.2
_S1_R, _S1_G, _S1_B = 0.1, 0.4, 0.8

_S2_CX, _S2_CY, _S2_CZ = 0.2, 0.7, 0.3
_S2_RADIUS = 0.2
_S2_R, _S2_G, _S2_B = 0.2, 0.7, 0.3

# The single-sqrt simplification and the squared-distance color predicate used
# in the kernel are ONLY valid because the two radii are identical.  If a
# radius ever changes, the kernel must compute both sqrt-distances.
assert _S1_RADIUS == _S2_RADIUS, "kernel shortcuts require equal radii"


def _two_sphere_kernel(pts_ref, sdf_ref, color_ref):
    # pts_ref:   (3, R, 128)  x/y/z components, each an (8k,128)-dense tile
    # sdf_ref:   (R, 128)
    # color_ref: (3, R, 128)
    x = pts_ref[0]                      # (R, 128) dense vregs
    y = pts_ref[1]
    z = pts_ref[2]

    # Squared distances to each center: pure per-lane VPU math, no XLU.
    dx1 = x - _S1_CX
    dy1 = y - _S1_CY
    dz1 = z - _S1_CZ
    sq1 = dx1 * dx1 + dy1 * dy1 + dz1 * dz1

    dx2 = x - _S2_CX
    dy2 = y - _S2_CY
    dz2 = z - _S2_CZ
    sq2 = dx2 * dx2 + dy2 * dy2 + dz2 * dz2

    # Equal radii: min(sqrt(a), sqrt(b)) - r == sqrt(min(a, b)) - r → one sqrt.
    sdf_ref[...] = jnp.sqrt(jnp.minimum(sq1, sq2)) - _S1_RADIUS

    # sq1 <= sq2  <=>  d1 <= d2 (equal radii, sqrt monotone); keeps the color
    # select off the EUP sqrt critical path.
    pred = sq1 <= sq2
    color_ref[0] = jnp.where(pred, _S1_R, _S2_R)
    color_ref[1] = jnp.where(pred, _S1_G, _S2_G)
    color_ref[2] = jnp.where(pred, _S1_B, _S2_B)


def _round_up(n, m):
    return ((n + m - 1) // m) * m


@functools.partial(jax.jit, static_argnames=("block_b",))
def simple_implicit_model(points_xyz, *, block_b=131072):
    """points_xyz: [B, 3] float32 -> (sdf [B, 1], color [B, 3])."""
    points_xyz = points_xyz.astype(jnp.float32)
    B, C = points_xyz.shape
    assert C == 3, "points_xyz must be [B, 3]"

    # Balanced tiles: nb blocks of tb points each; tb is a multiple of 1024 so
    # each per-component tile is (8k, 128)-dense; padding is < nb*1024 points
    # (never "round B up to a multiple of a huge block").
    nb = max(1, pl.cdiv(B, block_b))
    if B > 2048:
        nb = max(nb, 2)                 # v7x: grid >= 2 → both TensorCores run
    tb = _round_up(pl.cdiv(B, nb), 1024)
    B_pad = nb * tb
    rows = B_pad // 128
    trows = tb // 128

    # Lane-major view + free reshape to (3, rows, 128); the transpose / pad /
    # output slices fuse under jax.jit instead of being extra HBM passes.
    pts_t = points_xyz.T                                    # (3, B)
    if B_pad != B:
        pts_t = jnp.pad(pts_t, ((0, 0), (0, B_pad - B)))
    pts_3d = pts_t.reshape(3, rows, 128)

    sdf_3d, color_3d = pl.pallas_call(
        _two_sphere_kernel,
        out_shape=(
            jax.ShapeDtypeStruct((rows, 128), jnp.float32),
            jax.ShapeDtypeStruct((3, rows, 128), jnp.float32),
        ),
        grid_spec=pltpu.PrefetchScalarGridSpec(
            num_scalar_prefetch=0,
            grid=(nb,),
            in_specs=[pl.BlockSpec((3, trows, 128), lambda i: (0, i, 0))],
            out_specs=[
                pl.BlockSpec((trows, 128), lambda i: (i, 0)),
                pl.BlockSpec((3, trows, 128), lambda i: (0, i, 0)),
            ],
        ),
        compiler_params=pltpu.CompilerParams(
            dimension_semantics=("parallel",),
        ),
    )(pts_3d)

    sdf = sdf_3d.reshape(B_pad)[:B][:, None]                # (B, 1)
    color = color_3d.reshape(3, B_pad)[:, :B].T             # (B, 3)
    return sdf, color


def _reference(points_xyz):
    c1 = jnp.array([_S1_CX, _S1_CY, _S1_CZ], jnp.float32)
    c2 = jnp.array([_S2_CX, _S2_CY, _S2_CZ], jnp.float32)
    d1 = jnp.linalg.norm(points_xyz - c1, axis=1, keepdims=True) - _S1_RADIUS
    d2 = jnp.linalg.norm(points_xyz - c2, axis=1, keepdims=True) - _S2_RADIUS
    sdf = jnp.minimum(d1, d2)
    color = jnp.where(d1 <= d2,
                      jnp.array([_S1_R, _S1_G, _S1_B], jnp.float32),
                      jnp.array([_S2_R, _S2_G, _S2_B], jnp.float32))
    return sdf, color


if __name__ == "__main__":
    # Small batch (single tile, exercises the padding path).
    B = 200
    points = jax.random.uniform(jax.random.PRNGKey(0), (B, 3), dtype=jnp.float32)
    sdf, color = simple_implicit_model(points)
    jax.block_until_ready((sdf, color))

    sdf_ref, color_ref = _reference(points)
    assert sdf.shape == (B, 1) and color.shape == (B, 3)
    assert jnp.allclose(sdf, sdf_ref, atol=1e-5), "sdf mismatch"
    assert jnp.allclose(color, color_ref, atol=1e-6), "color mismatch"

    # Second small batch exercising grid > 1 (two balanced tiles) + padding.
    B2 = 2500
    points2 = jax.random.uniform(jax.random.PRNGKey(1), (B2, 3), dtype=jnp.float32)
    sdf2, color2 = simple_implicit_model(points2)
    jax.block_until_ready((sdf2, color2))
    sdf2_ref, color2_ref = _reference(points2)
    assert jnp.allclose(sdf2, sdf2_ref, atol=1e-5), "sdf mismatch (grid>1)"
    assert jnp.allclose(color2, color2_ref, atol=1e-6), "color mismatch (grid>1)"

    print("KERNEL_OK")
</pallas_src>

<mosaic_0001>
module attributes {stable_mosaic.version = 11 : i64} {
  func.func @_two_sphere_kernel(%arg0: i32, %arg1: memref<3x8x128xf32, #tpu.memory_space<vmem>>, %arg2: memref<8x128xf32, #tpu.memory_space<vmem>>, %arg3: memref<3x8x128xf32, #tpu.memory_space<vmem>>) attributes {dimension_semantics = [#tpu.dimension_semantics<parallel>], iteration_bounds = array<i64: 1>, scalar_prefetch = 0 : i64, scratch_operands = 0 : i64, tpu.core_type = #tpu.core_type<tc>, window_params = [{transform_indices = @transform_0, window_bounds = array<i64: 3, 8, 128>}, {transform_indices = @transform_1, window_bounds = array<i64: 8, 128>}, {transform_indices = @transform_2, window_bounds = array<i64: 3, 8, 128>}]} {
    %c0 = arith.constant 0 : index
    %c0_0 = arith.constant 0 : index
    %c0_1 = arith.constant 0 : index
    %0 = vector.load %arg1[%c0, %c0_0, %c0_1] : memref<3x8x128xf32, #tpu.memory_space<vmem>>, vector<1x8x128xf32>
    %1 = vector.shape_cast %0 : vector<1x8x128xf32> to vector<8x128xf32>
    %c1 = arith.constant 1 : index
    %c0_2 = arith.constant 0 : index
    %c0_3 = arith.constant 0 : index
    %2 = vector.load %arg1[%c1, %c0_2, %c0_3] : memref<3x8x128xf32, #tpu.memory_space<vmem>>, vector<1x8x128xf32>
    %3 = vector.shape_cast %2 : vector<1x8x128xf32> to vector<8x128xf32>
    %c2 = arith.constant 2 : index
    %c0_4 = arith.constant 0 : index
    %c0_5 = arith.constant 0 : index
    %4 = vector.load %arg1[%c2, %c0_4, %c0_5] : memref<3x8x128xf32, #tpu.memory_space<vmem>>, vector<1x8x128xf32>
    %5 = vector.shape_cast %4 : vector<1x8x128xf32> to vector<8x128xf32>
    %cst = arith.constant 5.000000e-01 : f32
    %6 = vector.broadcast %cst : f32 to vector<8x128xf32>
    %7 = arith.subf %1, %6 : vector<8x128xf32>
    %cst_6 = arith.constant 5.000000e-01 : f32
    %8 = vector.broadcast %cst_6 : f32 to vector<8x128xf32>
    %9 = arith.subf %3, %8 : vector<8x128xf32>
    %cst_7 = arith.constant 5.000000e-01 : f32
    %10 = vector.broadcast %cst_7 : f32 to vector<8x128xf32>
    %11 = arith.subf %5, %10 : vector<8x128xf32>
    %12 = arith.mulf %7, %7 : vector<8x128xf32>
    %13 = arith.mulf %9, %9 : vector<8x128xf32>
    %14 = arith.addf %12, %13 : vector<8x128xf32>
    %15 = arith.mulf %11, %11 : vector<8x128xf32>
    %16 = arith.addf %14, %15 : vector<8x128xf32>
    %cst_8 = arith.constant 2.000000e-01 : f32
    %17 = vector.broadcast %cst_8 : f32 to vector<8x128xf32>
    %18 = arith.subf %1, %17 : vector<8x128xf32>
    %cst_9 = arith.constant 0.699999988 : f32
    %19 = vector.broadcast %cst_9 : f32 to vector<8x128xf32>
    %20 = arith.subf %3, %19 : vector<8x128xf32>
    %cst_10 = arith.constant 3.000000e-01 : f32
    %21 = vector.broadcast %cst_10 : f32 to vector<8x128xf32>
    %22 = arith.subf %5, %21 : vector<8x128xf32>
    %23 = arith.mulf %18, %18 : vector<8x128xf32>
    %24 = arith.mulf %20, %20 : vector<8x128xf32>
    %25 = arith.addf %23, %24 : vector<8x128xf32>
    %26 = arith.mulf %22, %22 : vector<8x128xf32>
    %27 = arith.addf %25, %26 : vector<8x128xf32>
    %28 = arith.minimumf %16, %27 : vector<8x128xf32>
    %29 = math.sqrt %28 : vector<8x128xf32>
    %cst_11 = arith.constant 2.000000e-01 : f32
    %30 = vector.broadcast %cst_11 : f32 to vector<8x128xf32>
    %31 = arith.subf %29, %30 : vector<8x128xf32>
    %c0_12 = arith.constant 0 : index
    %c0_13 = arith.constant 0 : index
    %32 = vector.load %arg2[%c0_12, %c0_13] : memref<8x128xf32, #tpu.memory_space<vmem>>, vector<8x128xf32>
    tpu.vector_store %arg2[%c0_12, %c0_13], %31 {strides = array<i32>} : memref<8x128xf32, #tpu.memory_space<vmem>>, vector<8x128xf32>,
    %33 = arith.cmpf ole, %16, %27 : vector<8x128xf32>
    %cst_14 = arith.constant 1.000000e-01 : f32
    %cst_15 = arith.constant 2.000000e-01 : f32
    %34 = vector.broadcast %cst_14 : f32 to vector<8x128xf32>
    %35 = vector.broadcast %cst_15 : f32 to vector<8x128xf32>
    %36 = arith.select %33, %34, %35 : vector<8x128xi1>, vector<8x128xf32>
    %c0_16 = arith.constant 0 : index
    %c0_17 = arith.constant 0 : index
    %c0_18 = arith.constant 0 : index
    %37 = vector.load %arg3[%c0_16, %c0_17, %c0_18] : memref<3x8x128xf32, #tpu.memory_space<vmem>>, vector<1x8x128xf32>
    %38 = vector.shape_cast %37 : vector<1x8x128xf32> to vector<8x128xf32>
    %39 = vector.shape_cast %36 : vector<8x128xf32> to vector<1x8x128xf32>
    tpu.vector_store %arg3[%c0_16, %c0_17, %c0_18], %39 {strides = array<i32>} : memref<3x8x128xf32, #tpu.memory_space<vmem>>, vector<1x8x128xf32>,
    %cst_19 = arith.constant 4.000000e-01 : f32
    %cst_20 = arith.constant 0.699999988 : f32
    %40 = vector.broadcast %cst_19 : f32 to vector<8x128xf32>
    %41 = vector.broadcast %cst_20 : f32 to vector<8x128xf32>
    %42 = arith.select %33, %40, %41 : vector<8x128xi1>, vector<8x128xf32>
    %c1_21 = arith.constant 1 : index
    %c0_22 = arith.constant 0 : index
    %c0_23 = arith.constant 0 : index
    %43 = vector.load %arg3[%c1_21, %c0_22, %c0_23] : memref<3x8x128xf32, #tpu.memory_space<vmem>>, vector<1x8x128xf32>
    %44 = vector.shape_cast %43 : vector<1x8x128xf32> to vector<8x128xf32>
    %45 = vector.shape_cast %42 : vector<8x128xf32> to vector<1x8x128xf32>
    tpu.vector_store %arg3[%c1_21, %c0_22, %c0_23], %45 {strides = array<i32>} : memref<3x8x128xf32, #tpu.memory_space<vmem>>, vector<1x8x128xf32>,
    %cst_24 = arith.constant 8.000000e-01 : f32
    %cst_25 = arith.constant 3.000000e-01 : f32
    %46 = vector.broadcast %cst_24 : f32 to vector<8x128xf32>
    %47 = vector.broadcast %cst_25 : f32 to vector<8x128xf32>
    %48 = arith.select %33, %46, %47 : vector<8x128xi1>, vector<8x128xf32>
    %c2_26 = arith.constant 2 : index
    %c0_27 = arith.constant 0 : index
    %c0_28 = arith.constant 0 : index
    %49 = vector.load %arg3[%c2_26, %c0_27, %c0_28] : memref<3x8x128xf32, #tpu.memory_space<vmem>>, vector<1x8x128xf32>
    %50 = vector.shape_cast %49 : vector<1x8x128xf32> to vector<8x128xf32>
    %51 = vector.shape_cast %48 : vector<8x128xf32> to vector<1x8x128xf32>
    tpu.vector_store %arg3[%c2_26, %c0_27, %c0_28], %51 {strides = array<i32>} : memref<3x8x128xf32, #tpu.memory_space<vmem>>, vector<1x8x128xf32>,
    return
  }
  func.func @transform_0(%arg0: i32) -> (i32, i32, i32) {
    %c0_i32 = arith.constant 0 : i32
    %c0_i32_0 = arith.constant 0 : i32
    %c0_i32_1 = arith.constant 0 : i32
    return %c0_i32, %arg0, %c0_i32_0 : i32, i32, i32
  }
  func.func @transform_1(%arg0: i32) -> (i32, i32) {
    %c0_i32 = arith.constant 0 : i32
    %c0_i32_0 = arith.constant 0 : i32
    return %arg0, %c0_i32 : i32, i32
  }
  func.func @transform_2(%arg0: i32) -> (i32, i32, i32) {
    %c0_i32 = arith.constant 0 : i32
    %c0_i32_0 = arith.constant 0 : i32
    %c0_i32_1 = arith.constant 0 : i32
    return %c0_i32, %arg0, %c0_i32_0 : i32, i32, i32
  }
}

</mosaic_0001>

<llo_original>
// kernel: simple_implicit_model.1
$region0: #{simple_implicit_model.1}
  #allocation0 [shape = 'u32[]', space=smem, size = 0x4, offset = 0x4, fixed_abs, tag = 'smem constant byte address 0x4 - core index']
  #allocation1 [shape = 'u32[144,128]{1,0:T(1,128)}', space=vmem, size = 0x12000, scoped, tag = 'internal scratch']
  %s0 = inlined_call_operand.vmem [shape: f32[3,8,128], index: 0, kind: input, shape index: {}]
  %s1 = inlined_call_operand.vmem [shape: f32[8,128], index: 1, kind: output, shape index: {0}]
  %s2 = inlined_call_operand.vmem [shape: f32[3,8,128], index: 2, kind: output, shape index: {1}]
  %3 = xla_tuple %s1, %s2
  %s4 = sld [smem:[#allocation0]]
  $region22: #{simple_implicit_model.1} parent=0
    _
  %s6 = ssub.s32 1, %s4
  %s7 = scalar_select 0, %s6, %s4
  // Predicated region
  $region2: #{simple_implicit_model.1} parent=0 // pred_check
    _
  $region3: #{simple_implicit_model.1} parent=0 // pred_check_branch
    %9 = sbr.rel (0) target = $region5
  $region4: #{simple_implicit_model.1} parent=0 // pred_region
    _
  $region5: #{simple_implicit_model.1} parent=0 // pred_fallthru
    _
  %v10 = vld [vmem:[%s0] sm:$0xff]
  %s11 = scalar_lea.vmem %s0, 8
  %v12 = vld [vmem:[%s11] sm:$0xff]
  %s13 = scalar_lea.vmem %s0, 16
  %v14 = vld [vmem:[%s13] sm:$0xff]
  %v15 = vsub.f32 %v10, 0.5
  %v16 = vsub.f32 %v12, 0.5
  %v17 = vsub.f32 %v14, 0.5
  %v18 = vmul.f32 %v15, %v15
  %v19 = vmul.f32 %v16, %v16
  %v20 = vadd.f32 %v18, %v19
  %v21 = vmul.f32 %v17, %v17
  %v22 = vadd.f32 %v20, %v21
  %v23 = vsub.f32 %v10, 0.2
  %v24 = vsub.f32 %v12, 0.7
  %v25 = vsub.f32 %v14, 0.3
  %v26 = vmul.f32 %v23, %v23
  %v27 = vmul.f32 %v24, %v24
  %v28 = vadd.f32 %v26, %v27
  %v29 = vmul.f32 %v25, %v25
  %v30 = vadd.f32 %v28, %v29
  %v31 = vmin.f32 %v22, %v30
  %v32 = vrsqrt.pop %v31
  %v33 = vmul.f32 %v31, %v32
  %vm34 = vcmp.eq.f32.partialorder %v31, inf
  %v35 = vsel %vm34, %v31, %v33
  %vm36 = vcmp.eq.f32.partialorder %v31, 0.0
  %v37 = vand.u32 %v31, 2147483648
  %v38 = vsel %vm36, %v37, %v35
  %v39 = vsub.f32 %v38, 0.2
  %40 = vst [vmem:[%s1] sm:$0xff] %v39
  %vm41 = vcmp.le.f32.partialorder %v22, %v30
  %v42 = vsel %vm41, 0.1, 0.2
  %43 = vst [vmem:[%s2] sm:$0xff] %v42
  %v44 = vsel %vm41, 0.4, 0.7
  %s45 = scalar_lea.vmem %s2, 8
  %46 = vst [vmem:[%s45] sm:$0xff] %v44
  %v47 = vsel %vm41, 0.8, 0.3
  %s48 = scalar_lea.vmem %s2, 16
  %49 = vst [vmem:[%s48] sm:$0xff] %v47
  // Predicated region
  $region6: #{simple_implicit_model.1} parent=0 // pred_check
    _
  $region7: #{simple_implicit_model.1} parent=0 // pred_check_branch
    %51 = sbr.rel (0) target = $region9
  $region8: #{simple_implicit_model.1} parent=0 // pred_region
    _
  $region9: #{simple_implicit_model.1} parent=0 // pred_fallthru
    _
  // Predicated region
  $region10: #{simple_implicit_model.1} parent=0 // pred_check
    _
  $region11: #{simple_implicit_model.1} parent=0 // pred_check_branch
    %53 = sbr.rel (0) target = $region13
  $region12: #{simple_implicit_model.1} parent=0 // pred_region
    _
  $region13: #{simple_implicit_model.1} parent=0 // pred_fallthru
    _
  // Predicated region
  $region14: #{simple_implicit_model.1} parent=0 // pred_check
    _
  $region15: #{simple_implicit_model.1} parent=0 // pred_check_branch
    %55 = sbr.rel (0) target = $region17
  $region16: #{simple_implicit_model.1} parent=0 // pred_region
    _
  $region17: #{simple_implicit_model.1} parent=0 // pred_fallthru
    _
  // Predicated region
  $region18: #{simple_implicit_model.1} parent=0 // pred_check
    _
  $region19: #{simple_implicit_model.1} parent=0 // pred_check_branch
    %57 = sbr.rel (0) target = $region21
  $region20: #{simple_implicit_model.1} parent=0 // pred_region
    _
  $region21: #{simple_implicit_model.1} parent=0 // pred_fallthru
    _

</llo_original>
